<compile_context>
chip_gen: v5e
topology: v5e:2x2
jax: 0.10.0
libtpu: 0.0.40
codegen_flags: <defaults>
</compile_context>

<pallas_src>
import functools
import re

import jax
import jax.numpy as jnp
from jax.experimental import pallas as pl
from jax.experimental.pallas import tpu as pltpu


# --------------------------------------------------------------------------
# small helpers
# --------------------------------------------------------------------------
def _round_up(x, m):
    return (x + m - 1) // m * m


def _cdiv(a, b):
    return -(-a // b)


def _tpu_generation():
    """Best-effort TPU generation from device_kind ('TPU v5 lite' -> 5)."""
    try:
        kind = jax.devices()[0].device_kind
    except Exception:
        return None
    mt = re.search(r"(\d+)", kind)
    return int(mt.group(1)) if mt else None


def _vmem_capacity_bytes():
    try:
        return int(pltpu.get_tpu_info().vmem_capacity_bytes)
    except Exception:
        gen = _tpu_generation()
        # v7x: 64 MiB / TensorCore; v5e/v6e: 128 MiB.
        return (64 << 20) if (gen is not None and gen >= 7) else (128 << 20)


# --------------------------------------------------------------------------
# kernels
# --------------------------------------------------------------------------
def _ffn_kernel_resident(x_ref, w1_ref, b1_ref, w2_ref, b2_ref, o_ref):
    """Weights fully resident in VMEM; grid = (row_tiles,)."""
    h = jnp.dot(x_ref[...], w1_ref[...], preferred_element_type=jnp.float32)
    h = jnp.maximum(h + b1_ref[...].astype(jnp.float32), 0.0)
    y = jnp.dot(h.astype(w2_ref.dtype), w2_ref[...],
                preferred_element_type=jnp.float32)
    o_ref[...] = (y + b2_ref[...].astype(jnp.float32)).astype(o_ref.dtype)


def _ffn_kernel_stream(x_ref, w1_ref, b1_ref, w2_ref, b2_ref, o_ref, acc_ref):
    """Hidden dim streamed in panels; f32 VMEM scratch accumulator."""
    k = pl.program_id(1)
    h = jnp.dot(x_ref[...], w1_ref[...], preferred_element_type=jnp.float32)
    h = jnp.maximum(h + b1_ref[...].astype(jnp.float32), 0.0)
    p = jnp.dot(h.astype(w2_ref.dtype), w2_ref[...],
                preferred_element_type=jnp.float32)

    @pl.when(k == 0)
    def _():
        acc_ref[...] = p            # write-through: no zero-init + reload

    @pl.when(k != 0)
    def _():
        acc_ref[...] += p

    @pl.when(k == pl.num_programs(1) - 1)
    def _():
        o_ref[...] = (acc_ref[...] + b2_ref[...].astype(jnp.float32)
                      ).astype(o_ref.dtype)


def _ffn_kernel_stream_f32out(x_ref, w1_ref, b1_ref, w2_ref, b2_ref, o_ref):
    """Streamed panels, f32 output: accumulate directly in the resident
    output block (its index map ignores k) -- no separate scratch."""
    k = pl.program_id(1)
    h = jnp.dot(x_ref[...], w1_ref[...], preferred_element_type=jnp.float32)
    h = jnp.maximum(h + b1_ref[...].astype(jnp.float32), 0.0)
    p = jnp.dot(h.astype(w2_ref.dtype), w2_ref[...],
                preferred_element_type=jnp.float32)

    @pl.when(k == 0)
    def _():
        o_ref[...] = p + b2_ref[...].astype(jnp.float32)

    @pl.when(k != 0)
    def _():
        o_ref[...] += p


# --------------------------------------------------------------------------
# tile / VMEM planning (trace-time, pure Python)
# --------------------------------------------------------------------------
def _select_plan(m, d_in, d_hid_p, d_out_p, in_itemsize, out_itemsize,
                 tile_rows, tile_hidden, allow_resident, acc_in_out):
    gen = _tpu_generation()
    cap = _vmem_capacity_bytes()
    budget = int(cap * 0.80)          # leave headroom for pipeline internals

    # Generation-specific row-tile defaults (roofline crossover for weight
    # re-streaming: ~240 rows on v5e, ~700 on v6e, ~310/TC on v7x).
    if tile_rows is None:
        if gen is not None and gen >= 7:
            tile_rows = 512           # must also fit 64 MiB VMEM / TC
        elif gen == 6:
            tile_rows = 1024
        elif gen is not None:
            tile_rows = 384           # v5e and older
        else:
            tile_rows = 512
    if tile_hidden is None:
        tile_hidden = 512 if (gen is None or gen >= 7) else 1024

    # Row-tile upper bound: never pad tiny inputs beyond need; on v7x keep at
    # least 2 row tiles so both TensorCores get work on the parallel axis.
    tr_cap = _round_up(m, 8)
    if (gen is None or gen >= 7) and m > 8:
        tr_cap = min(tr_cap, max(8, _round_up(_cdiv(m, 2), 8)))
    tr = max(8, min(_round_up(tile_rows, 8), tr_cap))

    # ---- weights-resident fast path (footprint-keyed) ----------------------
    def fp_resident(tr_):
        return (2 * in_itemsize * (tr_ * d_in + d_in * d_hid_p + d_hid_p
                                   + d_hid_p * d_out_p + d_out_p)
                + 2 * out_itemsize * tr_ * d_out_p)

    if allow_resident and fp_resident(8) <= budget:
        while tr > 8 and fp_resident(tr) > budget:
            tr = max(8, _round_up(tr // 2, 8))
        return dict(resident=True, tr=tr, t_hid=d_hid_p,
                    footprint=fp_resident(tr), cap=cap)

    # ---- streamed hidden panels --------------------------------------------
    # Panel size: multiple of 128 that divides d_hid_p (no dead columns).
    t_hid = min(_round_up(tile_hidden, 128), d_hid_p)
    while d_hid_p % t_hid:
        t_hid -= 128

    def fp_stream(tr_, th_):
        f = (2 * in_itemsize * (tr_ * d_in + d_in * th_ + th_
                                + th_ * d_out_p + d_out_p)
             + 2 * out_itemsize * tr_ * d_out_p)
        if not acc_in_out:
            f += 4 * tr_ * d_out_p    # f32 scratch accumulator
        return f

    while tr > 8 and fp_stream(tr, t_hid) > budget:
        tr = max(8, _round_up(tr // 2, 8))
    while t_hid > 128 and fp_stream(tr, t_hid) > budget:
        t_hid -= 128
        while d_hid_p % t_hid:
            t_hid -= 128

    return dict(resident=False, tr=tr, t_hid=t_hid,
                footprint=fp_stream(tr, t_hid), cap=cap)


# --------------------------------------------------------------------------
# public API
# --------------------------------------------------------------------------
def prepare_ffn_params(w1, b1, w2, b2, compute_dtype=jnp.bfloat16):
    """Cast + pad weights ONCE (outside the per-step hot path).

    Returns ((w1p, b1p, w2p, b2p), d_out).  Padding is independent of the
    activation shape (hidden/out padded to multiples of 128), so the padded
    params can be cached and reused for every call.
    """
    d_in, d_hid = w1.shape
    d_out = w2.shape[1]
    d_hid_p = _round_up(d_hid, 128)
    d_out_p = _round_up(d_out, 128)
    w1p = jnp.pad(w1.astype(compute_dtype), ((0, 0), (0, d_hid_p - d_hid)))
    b1p = jnp.pad(b1.astype(compute_dtype),
                  (0, d_hid_p - d_hid)).reshape(1, d_hid_p)
    w2p = jnp.pad(w2.astype(compute_dtype),
                  ((0, d_hid_p - d_hid), (0, d_out_p - d_out)))
    b2p = jnp.pad(b2.astype(compute_dtype),
                  (0, d_out_p - d_out)).reshape(1, d_out_p)
    return (w1p, b1p, w2p, b2p), d_out


@functools.partial(jax.jit, static_argnames=("d_out", "tile_rows",
                                             "tile_hidden", "allow_resident"))
def ffn_apply(x, w1p, b1p, w2p, b2p, *, d_out, tile_rows=None,
              tile_hidden=None, allow_resident=True):
    """x: (..., d_in) -> (..., d_out), using pre-padded params.

    Output dtype == x.dtype; matmuls run in the params' dtype (bf16 by
    default) with f32 accumulation inside the kernel.
    """
    out_dtype = x.dtype
    lead = x.shape[:-1]
    d_in = x.shape[-1]
    d_hid_p = w1p.shape[1]
    d_out_p = w2p.shape[1]
    cdtype = w1p.dtype
    in_itemsize = jnp.dtype(cdtype).itemsize
    out_itemsize = jnp.dtype(out_dtype).itemsize

    x2d = x.reshape(-1, d_in).astype(cdtype)
    m = x2d.shape[0]
    acc_in_out = (out_dtype == jnp.float32)

    plan = _select_plan(m, d_in, d_hid_p, d_out_p, in_itemsize, out_itemsize,
                        tile_rows, tile_hidden, allow_resident, acc_in_out)
    tr = plan["tr"]
    t_hid = plan["t_hid"]
    m_pad = _round_up(m, tr)
    if m_pad != m:
        x2d = jnp.pad(x2d, ((0, m_pad - m), (0, 0)))
    row_tiles = m_pad // tr

    # ---- VMEM scoped limit: real footprint + margin, capped by capacity ----
    fp = plan["footprint"]
    cap = plan["cap"]
    vmem_limit = int(min(cap - (2 << 20),
                         max(32 << 20, fp + max(fp // 4, 2 << 20))))
    vmem_limit = max(vmem_limit, fp + (1 << 20))   # never below the footprint

    # ---- cost estimate reflecting actual weight traffic --------------------
    w_bytes = in_itemsize * (d_in * d_hid_p + d_hid_p
                             + d_hid_p * d_out_p + d_out_p)
    w_passes = 1 if plan["resident"] else row_tiles
    cost = pl.CostEstimate(
        flops=2 * m_pad * d_in * d_hid_p + 2 * m_pad * d_hid_p * d_out_p,
        transcendentals=0,
        bytes_accessed=(in_itemsize * m_pad * d_in + w_passes * w_bytes
                        + out_itemsize * m_pad * d_out_p),
    )

    if plan["resident"]:
        out = pl.pallas_call(
            _ffn_kernel_resident,
            out_shape=jax.ShapeDtypeStruct((m_pad, d_out_p), out_dtype),
            grid=(row_tiles,),
            in_specs=[
                pl.BlockSpec((tr, d_in), lambda i: (i, 0)),         # x tile
                pl.BlockSpec((d_in, d_hid_p), lambda i: (0, 0)),    # W1 (resident)
                pl.BlockSpec((1, d_hid_p), lambda i: (0, 0)),       # b1
                pl.BlockSpec((d_hid_p, d_out_p), lambda i: (0, 0)), # W2 (resident)
                pl.BlockSpec((1, d_out_p), lambda i: (0, 0)),       # b2
            ],
            out_specs=pl.BlockSpec((tr, d_out_p), lambda i: (i, 0)),
            compiler_params=pltpu.CompilerParams(
                dimension_semantics=("parallel",),
                vmem_limit_bytes=vmem_limit),
            cost_estimate=cost,
        )(x2d, w1p, b1p, w2p, b2p)
    else:
        grid = (row_tiles, d_hid_p // t_hid)
        in_specs = [
            pl.BlockSpec((tr, d_in), lambda i, k: (i, 0)),          # x tile
            pl.BlockSpec((d_in, t_hid), lambda i, k: (0, k)),       # W1 panel
            pl.BlockSpec((1, t_hid), lambda i, k: (0, k)),          # b1 slice
            pl.BlockSpec((t_hid, d_out_p), lambda i, k: (k, 0)),    # W2 panel
            pl.BlockSpec((1, d_out_p), lambda i, k: (0, 0)),        # b2
        ]
        out_spec = pl.BlockSpec((tr, d_out_p), lambda i, k: (i, 0))
        cparams = pltpu.CompilerParams(
            dimension_semantics=("parallel", "arbitrary"),
            vmem_limit_bytes=vmem_limit)
        if acc_in_out:
            out = pl.pallas_call(
                _ffn_kernel_stream_f32out,
                out_shape=jax.ShapeDtypeStruct((m_pad, d_out_p), out_dtype),
                grid=grid, in_specs=in_specs, out_specs=out_spec,
                compiler_params=cparams, cost_estimate=cost,
            )(x2d, w1p, b1p, w2p, b2p)
        else:
            out = pl.pallas_call(
                _ffn_kernel_stream,
                out_shape=jax.ShapeDtypeStruct((m_pad, d_out_p), out_dtype),
                grid=grid, in_specs=in_specs, out_specs=out_spec,
                scratch_shapes=[pltpu.VMEM((tr, d_out_p), jnp.float32)],
                compiler_params=cparams, cost_estimate=cost,
            )(x2d, w1p, b1p, w2p, b2p)

    return out[:m, :d_out].reshape(*lead, d_out)


def position_wise_ffn(x, w1, b1, w2, b2, *, compute_dtype=jnp.bfloat16,
                      tile_rows=None, tile_hidden=None, allow_resident=True):
    """Convenience wrapper matching the PyTorch module's forward.

    Pads/casts the weights on every call -- for repeated use (training/serving
    loops) call prepare_ffn_params once and ffn_apply per step instead.
    """
    params, d_out = prepare_ffn_params(w1, b1, w2, b2,
                                       compute_dtype=compute_dtype)
    return ffn_apply(x, *params, d_out=d_out, tile_rows=tile_rows,
                     tile_hidden=tile_hidden, allow_resident=allow_resident)


# --------------------------------------------------------------------------
# params init + reference
# --------------------------------------------------------------------------
def init_ffn_params(key, d_in, d_hid, d_out, dtype=jnp.float32):
    """Deterministic init mimicking nn.Linear (uniform +/- 1/sqrt(fan_in))."""
    k1, k2, k3, k4 = jax.random.split(key, 4)
    lim1 = 1.0 / (d_in ** 0.5)
    lim2 = 1.0 / (d_hid ** 0.5)
    # PyTorch stores weight as (out, in); we keep the transposed (in, out).
    w1 = jax.random.uniform(k1, (d_in, d_hid), dtype, -lim1, lim1)
    b1 = jax.random.uniform(k2, (d_hid,), dtype, -lim1, lim1)
    w2 = jax.random.uniform(k3, (d_hid, d_out), dtype, -lim2, lim2)
    b2 = jax.random.uniform(k4, (d_out,), dtype, -lim2, lim2)
    return w1, b1, w2, b2


def _reference(x, w1, b1, w2, b2):
    return jnp.maximum(x @ w1 + b1, 0.0) @ w2 + b2


if __name__ == "__main__":
    key = jax.random.PRNGKey(0)

    # --- Test 1: module demo shapes, exact f32 parity (resident path) -------
    kx, kp = jax.random.split(key)
    batch, seq = 2, 8
    ffn_num_input, ffn_num_hiddens, ffn_num_outputs = 32, 64, 32
    x = jax.random.normal(kx, (batch, seq, ffn_num_input), dtype=jnp.float32)
    w1, b1, w2, b2 = init_ffn_params(kp, ffn_num_input, ffn_num_hiddens,
                                     ffn_num_outputs)

    y = jax.block_until_ready(
        position_wise_ffn(x, w1, b1, w2, b2, compute_dtype=jnp.float32))
    ref = _reference(x, w1, b1, w2, b2)
    assert y.shape == (batch, seq, ffn_num_outputs) and y.dtype == x.dtype
    assert jnp.allclose(y, ref, atol=1e-5, rtol=1e-5)

    # --- Test 2: default bf16 compute, prepare-once / apply hot path --------
    params_bf16, d_out_r = prepare_ffn_params(w1, b1, w2, b2)   # bf16 default
    y_bf = jax.block_until_ready(ffn_apply(x, *params_bf16, d_out=d_out_r))
    assert y_bf.shape == (batch, seq, ffn_num_outputs)
    assert y_bf.dtype == jnp.float32            # cast back to caller dtype
    assert jnp.allclose(y_bf, ref, atol=5e-2, rtol=5e-2)

    # --- Test 3: streamed hidden panels + ragged rows + padded d_out (f32) --
    kx2, kp2 = jax.random.split(jax.random.PRNGKey(1))
    b2_, s2_, di2, dh2, do2 = 2, 5, 32, 320, 40   # m=10 ragged, 3 hidden panels
    x_t = jax.random.normal(kx2, (b2_, s2_, di2), dtype=jnp.float32)
    p_t = init_ffn_params(kp2, di2, dh2, do2)
    y_t = jax.block_until_ready(
        position_wise_ffn(x_t, *p_t, compute_dtype=jnp.float32,
                          tile_hidden=128, allow_resident=False))
    ref_t = _reference(x_t, *p_t)
    assert y_t.shape == (b2_, s2_, do2)
    assert jnp.allclose(y_t, ref_t, atol=1e-4, rtol=1e-4)

    # --- Test 4: streamed path with bf16 output (scratch-accumulator kernel) -
    y_t_bf = jax.block_until_ready(
        position_wise_ffn(x_t.astype(jnp.bfloat16), *p_t,
                          tile_hidden=128, allow_resident=False))
    assert y_t_bf.shape == (b2_, s2_, do2) and y_t_bf.dtype == jnp.bfloat16
    assert jnp.allclose(y_t_bf.astype(jnp.float32), ref_t, atol=1e-1, rtol=1e-1)

    print("KERNEL_OK")
</pallas_src>

<mosaic_0001>
module attributes {stable_mosaic.version = 11 : i64} {
  func.func @_ffn_kernel_resident(%arg0: i32, %arg1: memref<8x32xf32, #tpu.memory_space<vmem>>, %arg2: memref<32x128xf32, #tpu.memory_space<vmem>>, %arg3: memref<1x128xf32, #tpu.memory_space<vmem>>, %arg4: memref<128x128xf32, #tpu.memory_space<vmem>>, %arg5: memref<1x128xf32, #tpu.memory_space<vmem>>, %arg6: memref<8x128xf32, #tpu.memory_space<vmem>>) attributes {dimension_semantics = [#tpu.dimension_semantics<parallel>], iteration_bounds = array<i64: 2>, scalar_prefetch = 0 : i64, scratch_operands = 0 : i64, tpu.core_type = #tpu.core_type<tc>, window_params = [{transform_indices = @transform_0, window_bounds = array<i64: 8, 32>}, {pipeline_mode = #tpu.pipeline_mode<synchronous>, transform_indices = @transform_1, window_bounds = array<i64: 32, 128>}, {pipeline_mode = #tpu.pipeline_mode<synchronous>, transform_indices = @transform_2, window_bounds = array<i64: 1, 128>}, {pipeline_mode = #tpu.pipeline_mode<synchronous>, transform_indices = @transform_3, window_bounds = array<i64: 128, 128>}, {pipeline_mode = #tpu.pipeline_mode<synchronous>, transform_indices = @transform_4, window_bounds = array<i64: 1, 128>}, {transform_indices = @transform_5, window_bounds = array<i64: 8, 128>}]} {
    %c0 = arith.constant 0 : index
    %c0_0 = arith.constant 0 : index
    %0 = vector.load %arg1[%c0, %c0_0] : memref<8x32xf32, #tpu.memory_space<vmem>>, vector<8x32xf32>
    %c0_1 = arith.constant 0 : index
    %c0_2 = arith.constant 0 : index
    %1 = vector.load %arg2[%c0_1, %c0_2] : memref<32x128xf32, #tpu.memory_space<vmem>>, vector<32x128xf32>
    %cst = arith.constant dense<0.000000e+00> : vector<8x128xf32>
    %2 = tpu.matmul %0, %1, %cst {dimension_numbers = #tpu.dot_dimension_numbers<[1], [0], [0], [1], [0, 0, 1, 1], [], []>} : vector<8x32xf32>, vector<32x128xf32>, vector<8x128xf32> -> vector<8x128xf32>
    %c0_3 = arith.constant 0 : index
    %c0_4 = arith.constant 0 : index
    %3 = vector.load %arg3[%c0_3, %c0_4] : memref<1x128xf32, #tpu.memory_space<vmem>>, vector<1x128xf32>
    %4 = vector.broadcast %3 : vector<1x128xf32> to vector<8x128xf32>
    %5 = arith.addf %2, %4 : vector<8x128xf32>
    %cst_5 = arith.constant 0.000000e+00 : f32
    %6 = vector.broadcast %cst_5 : f32 to vector<8x128xf32>
    %7 = arith.maximumf %5, %6 : vector<8x128xf32>
    %c0_6 = arith.constant 0 : index
    %c0_7 = arith.constant 0 : index
    %8 = vector.load %arg4[%c0_6, %c0_7] : memref<128x128xf32, #tpu.memory_space<vmem>>, vector<128x128xf32>
    %cst_8 = arith.constant dense<0.000000e+00> : vector<8x128xf32>
    %9 = tpu.matmul %7, %8, %cst_8 {dimension_numbers = #tpu.dot_dimension_numbers<[1], [0], [0], [1], [0, 0, 1, 1], [], []>} : vector<8x128xf32>, vector<128x128xf32>, vector<8x128xf32> -> vector<8x128xf32>
    %c0_9 = arith.constant 0 : index
    %c0_10 = arith.constant 0 : index
    %10 = vector.load %arg5[%c0_9, %c0_10] : memref<1x128xf32, #tpu.memory_space<vmem>>, vector<1x128xf32>
    %11 = vector.broadcast %10 : vector<1x128xf32> to vector<8x128xf32>
    %12 = arith.addf %9, %11 : vector<8x128xf32>
    %c0_11 = arith.constant 0 : index
    %c0_12 = arith.constant 0 : index
    %13 = vector.load %arg6[%c0_11, %c0_12] : memref<8x128xf32, #tpu.memory_space<vmem>>, vector<8x128xf32>
    tpu.vector_store %arg6[%c0_11, %c0_12], %12 {strides = array<i32>} : memref<8x128xf32, #tpu.memory_space<vmem>>, vector<8x128xf32>,
    return
  }
  func.func @transform_0(%arg0: i32) -> (i32, i32) {
    %c0_i32 = arith.constant 0 : i32
    %c0_i32_0 = arith.constant 0 : i32
    return %arg0, %c0_i32 : i32, i32
  }
  func.func @transform_1(%arg0: i32) -> (i32, i32) {
    %c0_i32 = arith.constant 0 : i32
    %c0_i32_0 = arith.constant 0 : i32
    %c0_i32_1 = arith.constant 0 : i32
    return %c0_i32, %c0_i32_0 : i32, i32
  }
  func.func @transform_2(%arg0: i32) -> (i32, i32) {
    %c0_i32 = arith.constant 0 : i32
    %c0_i32_0 = arith.constant 0 : i32
    %c0_i32_1 = arith.constant 0 : i32
    return %c0_i32, %c0_i32_0 : i32, i32
  }
  func.func @transform_3(%arg0: i32) -> (i32, i32) {
    %c0_i32 = arith.constant 0 : i32
    %c0_i32_0 = arith.constant 0 : i32
    %c0_i32_1 = arith.constant 0 : i32
    return %c0_i32, %c0_i32_0 : i32, i32
  }
  func.func @transform_4(%arg0: i32) -> (i32, i32) {
    %c0_i32 = arith.constant 0 : i32
    %c0_i32_0 = arith.constant 0 : i32
    %c0_i32_1 = arith.constant 0 : i32
    return %c0_i32, %c0_i32_0 : i32, i32
  }
  func.func @transform_5(%arg0: i32) -> (i32, i32) {
    %c0_i32 = arith.constant 0 : i32
    %c0_i32_0 = arith.constant 0 : i32
    return %arg0, %c0_i32 : i32, i32
  }
}

</mosaic_0001>

<llo_original>
// kernel: ffn_apply.1
$region0: #{ffn_apply.1}
  #allocation0 [shape = 'u32[]', space=smem, size = 0x4, offset = 0x4, fixed_abs, tag = 'smem constant byte address 0x4 - core index']
  #allocation1 [shape = 'u32[72,128]{1,0:T(1,128)}', space=vmem, size = 0x9000, scoped, tag = 'internal scratch']
  %s0 = inlined_call_operand.hbm [shape: f32[16,32], index: 0, kind: input, shape index: {}]
  %s1 = inlined_call_operand.hbm [shape: f32[32,128], index: 1, kind: input, shape index: {}]
  %s2 = inlined_call_operand.vmem [shape: f32[1,128], index: 2, kind: input, shape index: {}]
  %s3 = inlined_call_operand.hbm [shape: f32[128,128], index: 3, kind: input, shape index: {}]
  %s4 = inlined_call_operand.vmem [shape: f32[1,128], index: 4, kind: input, shape index: {}]
  %s5 = inlined_call_operand.vmem [shape: f32[16,128], index: 5, kind: output, shape index: {}]
  %s6 = sld [smem:[#allocation0]]
  $region65: #{ffn_apply.1} parent=0
    _
  %s8 = ssub.s32 1, %s6
  %s9 = scalar_select 0, %s8, %s6
  $region1: #{ffn_apply.1} parent=0
    #allocation2 [shape = 'u8[8192]{0}', space=vmem, size = 0x2000, scoped, tag = 'input window, operand 0']
    #allocation3 [shape = 's32[2]{0}', space=sflag, size = 0x8, scoped, tag = 'scoped memory for ffn_apply.1']
    #allocation4 [shape = 'u8[16384]{0}', space=vmem, size = 0x4000, scoped, tag = 'input window, operand 1, single buffered']
    #allocation5 [shape = 's32[1]{0}', space=sflag, size = 0x4, scoped, tag = 'scoped memory for ffn_apply.1']
    #allocation6 [shape = 'u8[65536]{0}', space=vmem, size = 0x10000, scoped, tag = 'input window, operand 3, single buffered']
    %10 = vsyncpa [#allocation3], 0
    %s11 = scalar_lea.sflag [#allocation3], 1
    %12 = vsyncpa %s11, 0
    %13 = vsyncpa [#allocation5], 0
    loop: start=0, step=1, limit=4
    $region2: #{ffn_apply.1} parent=1 // loop_pre_header
      _
    $region3: #{ffn_apply.1} parent=1 // loop_header
      %s15 = sphi 0, %s19
      %p16 = scmp.ge.s32.totalorder %s15, 4
      %s25 = sphi 0, %s27
      %s28 = sphi 0, %s25
      %s29 = sphi 0, %s28
      %s45 = sphi 0, %s29
      %s49 = sphi 0, %s49
      %s51 = sphi 0, %s49
      %s52 = sphi 0, %s51
      %s66 = sphi 0, %s52
      %s70 = sphi 0, %s70
      %s72 = sphi 0, %s70
      %s73 = sphi 0, %s72
      %s87 = sphi 0, %s73
      %s91 = sphi 0, %s91
      %s93 = sphi 0, %s91
      %s94 = sphi 0, %s93
      %s108 = sphi 0, %s94
      %s112 = sphi 0, %s112
      %s114 = sphi 0, %s112
      %s115 = sphi 0, %s114
      %s129 = sphi 0, %s115
      %s135 = sphi 0, %s137
      %s138 = sphi 0, %s135
      %s139 = sphi 0, %s138
      %s155 = sphi 0, %s139
    $region4: #{ffn_apply.1} parent=1 // loop_header_branch
      %18 = sbr.rel (%p16) target = $region8
    $region5: #{ffn_apply.1} parent=1 // loop_body
      %s20 = ssub.s32 %s15, 1
      %s21 = ssub.s32 %s15, 2
      %s22 = sadd.s32 %s15, 1
      %s23 = ssub.s32 %s15, %s22
      %p24 = scmp.eq.s32.totalorder %s23, 0
      %s26 = sadd.s32 %s25, 1
      %s27 = scalar_select %p24, %s25, %s26
      %p30 = pneg %p24
      %p31 = scmp.eq.s32.totalorder %s15, 1
      %p32 = por %p30, %p31
      %p33 = scmp.ne.s32.totalorder %s25, %s28
      %p34 = scmp.eq.s32.totalorder %s15, 0
      %p35 = por %p33, %p34
      %p36 = scmp.ne.s32.totalorder %s25, %s28
      %p37 = scmp.eq.s32.totalorder %s20, 1
      %p38 = por %p36, %p37
      %p39 = scmp.ne.s32.totalorder %s28, %s29
      %p40 = scmp.eq.s32.totalorder %s20, 0
      %p41 = por %p39, %p40
      %p42 = scmp.ne.s32.totalorder %s28, %s29
      %p43 = scmp.eq.s32.totalorder %s21, 1
      %p44 = por %p42, %p43
      %p46 = scmp.ne.s32.totalorder %s29, %s45
      %p47 = scmp.eq.s32.totalorder %s21, 0
      %p48 = por %p46, %p47
      %s50 = sadd.s32 %s49, 1
      %p53 = scmp.eq.s32.totalorder %s15, 1
      %p54 = scmp.ne.s32.totalorder %s49, %s51
      %p55 = scmp.eq.s32.totalorder %s15, 0
      %p56 = por %p54, %p55
      %p57 = scmp.ne.s32.totalorder %s49, %s51
      %p58 = scmp.eq.s32.totalorder %s20, 1
      %p59 = por %p57, %p58
      %p60 = scmp.ne.s32.totalorder %s51, %s52
      %p61 = scmp.eq.s32.totalorder %s20, 0
      %p62 = por %p60, %p61
      %p63 = scmp.ne.s32.totalorder %s51, %s52
      %p64 = scmp.eq.s32.totalorder %s21, 1
      %p65 = por %p63, %p64
      %p67 = scmp.ne.s32.totalorder %s52, %s66
      %p68 = scmp.eq.s32.totalorder %s21, 0
      %p69 = por %p67, %p68
      %s71 = sadd.s32 %s70, 1
      %p74 = scmp.eq.s32.totalorder %s15, 1
      %p75 = scmp.ne.s32.totalorder %s70, %s72
      %p76 = scmp.eq.s32.totalorder %s15, 0
      %p77 = por %p75, %p76
      %p78 = scmp.ne.s32.totalorder %s70, %s72
      %p79 = scmp.eq.s32.totalorder %s20, 1
      %p80 = por %p78, %p79
      %p81 = scmp.ne.s32.totalorder %s72, %s73
      %p82 = scmp.eq.s32.totalorder %s20, 0
      %p83 = por %p81, %p82
      %p84 = scmp.ne.s32.totalorder %s72, %s73
      %p85 = scmp.eq.s32.totalorder %s21, 1
      %p86 = por %p84, %p85
      %p88 = scmp.ne.s32.totalorder %s73, %s87
      %p89 = scmp.eq.s32.totalorder %s21, 0
      %p90 = por %p88, %p89
      %s92 = sadd.s32 %s91, 1
      %p95 = scmp.eq.s32.totalorder %s15, 1
      %p96 = scmp.ne.s32.totalorder %s91, %s93
      %p97 = scmp.eq.s32.totalorder %s15, 0
      %p98 = por %p96, %p97
      %p99 = scmp.ne.s32.totalorder %s91, %s93
      %p100 = scmp.eq.s32.totalorder %s20, 1
      %p101 = por %p99, %p100
      %p102 = scmp.ne.s32.totalorder %s93, %s94
      %p103 = scmp.eq.s32.totalorder %s20, 0
      %p104 = por %p102, %p103
      %p105 = scmp.ne.s32.totalorder %s93, %s94
      %p106 = scmp.eq.s32.totalorder %s21, 1
      %p107 = por %p105, %p106
      %p109 = scmp.ne.s32.totalorder %s94, %s108
      %p110 = scmp.eq.s32.totalorder %s21, 0
      %p111 = por %p109, %p110
      %s113 = sadd.s32 %s112, 1
      %p116 = scmp.eq.s32.totalorder %s15, 1
      %p117 = scmp.ne.s32.totalorder %s112, %s114
      %p118 = scmp.eq.s32.totalorder %s15, 0
      %p119 = por %p117, %p118
      %p120 = scmp.ne.s32.totalorder %s112, %s114
      %p121 = scmp.eq.s32.totalorder %s20, 1
      %p122 = por %p120, %p121
      %p123 = scmp.ne.s32.totalorder %s114, %s115
      %p124 = scmp.eq.s32.totalorder %s20, 0
      %p125 = por %p123, %p124
      %p126 = scmp.ne.s32.totalorder %s114, %s115
      %p127 = scmp.eq.s32.totalorder %s21, 1
      %p128 = por %p126, %p127
      %p130 = scmp.ne.s32.totalorder %s115, %s129
      %p131 = scmp.eq.s32.totalorder %s21, 0
      %p132 = por %p130, %p131
      %s133 = ssub.s32 %s15, %s22
      %p134 = scmp.eq.s32.totalorder %s133, 0
      %s136 = sadd.s32 %s135, 1
      %s137 = scalar_select %p134, %s135, %s136
      %p140 = pneg %p134
      %p141 = scmp.eq.s32.totalorder %s15, 1
      %p142 = por %p140, %p141
      %p143 = scmp.ne.s32.totalorder %s135, %s138
      %p144 = scmp.eq.s32.totalorder %s15, 0
      %p145 = por %p143, %p144
      %p146 = scmp.ne.s32.totalorder %s135, %s138
      %p147 = scmp.eq.s32.totalorder %s20, 1
      %p148 = por %p146, %p147
      %p149 = scmp.ne.s32.totalorder %s138, %s139
      %p150 = scmp.eq.s32.totalorder %s20, 0
      %p151 = por %p149, %p150
      %p152 = scmp.ne.s32.totalorder %s138, %s139
      %p153 = scmp.eq.s32.totalorder %s21, 1
      %p154 = por %p152, %p153
      %p156 = scmp.ne.s32.totalorder %s139, %s155
      %p157 = scmp.eq.s32.totalorder %s21, 0
      %p158 = por %p156, %p157
      %p159 = scmp.le.s32.totalorder 1, %s15
      %p160 = scmp.lt.s32.totalorder %s15, 3
      %p161 = pnand %p159, %p160
      %p162 = pneg %p161
      // Predicated region
      $region9: #{ffn_apply.1} parent=5 // pred_check
        _
      $region10: #{ffn_apply.1} parent=5 // pred_check_branch
        %164 = sbr.rel (%p161) target = $region12
      $region11: #{ffn_apply.1} parent=5 // pred_region
        %s165 = ssub.s32 %s15, 1
        // Predicated region
        $region13: #{ffn_apply.1} parent=11 // pred_check
          %p166 = pneg %p62
        $region14: #{ffn_apply.1} parent=11 // pred_check_branch
          %168 = sbr.rel (%p166) target = $region16
        $region15: #{ffn_apply.1} parent=11 // pred_region
          %170 = vsyncadd [#allocation5], 0
          %s171 = sshll.u32 %s1, 4
          %s172 = int_to_ptr.hbm [resolvable:$true] %s171
          %s173 = sshll.u32 [#allocation4], 4
          %s174 = int_to_ptr.vmem [resolvable:$true] %s173
          %179 = dma.hbm_to_vmem [thread:$0]  %s172, 512, %s174, [#allocation5], 128, 128, 8
        $region16: #{ffn_apply.1} parent=11 // pred_fallthru
          _
        // Predicated region
        $region17: #{ffn_apply.1} parent=11 // pred_check
          %p180 = pneg %p83
        $region18: #{ffn_apply.1} parent=11 // pred_check_branch
          %182 = sbr.rel (%p180) target = $region20
        $region19: #{ffn_apply.1} parent=11 // pred_region
          _
        $region20: #{ffn_apply.1} parent=11 // pred_fallthru
          _
        // Predicated region
        $region21: #{ffn_apply.1} parent=11 // pred_check
          %p183 = pneg %p104
        $region22: #{ffn_apply.1} parent=11 // pred_check_branch
          %185 = sbr.rel (%p183) target = $region24
        $region23: #{ffn_apply.1} parent=11 // pred_region
          %187 = vsyncadd [#allocation5], 0
          %s188 = sshll.u32 %s3, 4
          %s189 = int_to_ptr.hbm [resolvable:$true] %s188
          %s190 = sshll.u32 [#allocation6], 4
          %s191 = int_to_ptr.vmem [resolvable:$true] %s190
          %196 = dma.hbm_to_vmem [thread:$0]  %s189, 2048, %s191, [#allocation5], 128, 128, 8
        $region24: #{ffn_apply.1} parent=11 // pred_fallthru
          _
        // Predicated region
        $region25: #{ffn_apply.1} parent=11 // pred_check
          %p197 = pneg %p125
        $region26: #{ffn_apply.1} parent=11 // pred_check_branch
          %199 = sbr.rel (%p197) target = $region28
        $region27: #{ffn_apply.1} parent=11 // pred_region
          _
        $region28: #{ffn_apply.1} parent=11 // pred_fallthru
          _
      $region12: #{ffn_apply.1} parent=5 // pred_fallthru
        _
      %p200 = scmp.lt.s32.totalorder %s15, 2
      // Predicated region
      $region29: #{ffn_apply.1} parent=5 // pred_check
        %p201 = pneg %p200
      $region30: #{ffn_apply.1} parent=5 // pred_check_branch
        %203 = sbr.rel (%p201) target = $region32
      $region31: #{ffn_apply.1} parent=5 // pred_region
        // Predicated region
        $region33: #{ffn_apply.1} parent=31 // pred_check
          %p204 = pneg %p35
        $region34: #{ffn_apply.1} parent=31 // pred_check_branch
          %206 = sbr.rel (%p204) target = $region36
        $region35: #{ffn_apply.1} parent=31 // pred_region
          %s207 = sand.u32 %s25, 1
          %s208 = scalar_lea.sflag [#allocation3], %s207
          %s209 = sand.u32 %s25, 1
          %s210 = smul.addr %s209, 8
          %s211 = scalar_lea.vmem [#allocation2], %s210
          %213 = vsyncadd %s208, 0
          %s214 = smul.addr %s15, 8
          %s215 = scalar_lea.hbm %s0, %s214
          %s217 = sshll.u32 %s215, 4
          %s218 = int_to_ptr.hbm [resolvable:$true] %s217
          %s219 = sshll.u32 %s211, 4
          %s220 = int_to_ptr.vmem [resolvable:$true] %s219
          %222 = dma.hbm_to_vmem [thread:$0]  %s218, 128, %s220, %s208
        $region36: #{ffn_apply.1} parent=31 // pred_fallthru
          _
      $region32: #{ffn_apply.1} parent=5 // pred_fallthru
        _
      %p223 = scmp.le.s32.totalorder 1, %s15
      %p224 = scmp.lt.s32.totalorder %s15, 3
      %p225 = pnand %p223, %p224
      %p226 = pneg %p225
      // Predicated region
      $region37: #{ffn_apply.1} parent=5 // pred_check
        _
      $region38: #{ffn_apply.1} parent=5 // pred_check_branch
        %228 = sbr.rel (%p225) target = $region40
      $region39: #{ffn_apply.1} parent=5 // pred_region
        %s229 = ssub.s32 %s15, 1
        %s230 = sand.u32 %s28, 1
        %s231 = scalar_lea.sflag [#allocation3], %s230
        %s232 = sand.u32 %s28, 1
        %s233 = smul.addr %s232, 8
        %s234 = scalar_lea.vmem [#allocation2], %s233
        // Predicated region
        $region41: #{ffn_apply.1} parent=39 // pred_check
          %p235 = pneg %p41
        $region42: #{ffn_apply.1} parent=39 // pred_check_branch
          %237 = sbr.rel (%p235) target = $region44
        $region43: #{ffn_apply.1} parent=39 // pred_region
          %239 = dma.done %s231, 128
        $region44: #{ffn_apply.1} parent=39 // pred_fallthru
          _
        // Predicated region
        $region45: #{ffn_apply.1} parent=39 // pred_check
          %p240 = pneg %p62
        $region46: #{ffn_apply.1} parent=39 // pred_check_branch
          %242 = sbr.rel (%p240) target = $region48
        $region47: #{ffn_apply.1} parent=39 // pred_region
          %244 = dma.done [#allocation5], 512
        $region48: #{ffn_apply.1} parent=39 // pred_fallthru
          _
        // Predicated region
        $region49: #{ffn_apply.1} parent=39 // pred_check
          %p245 = pneg %p104
        $region50: #{ffn_apply.1} parent=39 // pred_check_branch
          %247 = sbr.rel (%p245) target = $region52
        $region51: #{ffn_apply.1} parent=39 // pred_region
          %249 = dma.done [#allocation5], 2048
        $region52: #{ffn_apply.1} parent=39 // pred_fallthru
          _
        %s250 = sand.u32 %s28, 1
        %s251 = scalar_lea.sflag [#allocation3], %s250
        %s252 = sand.u32 %s28, 1
        %s253 = smul.addr %s252, 8
        %s254 = scalar_lea.vmem [#allocation2], %s253
        %p255 = pneg %p41
        %p256 = pneg %p38
        %p257 = pneg %p62
        %p258 = pneg %p59
        %p259 = pneg %p83
        %p260 = pneg %p80
        %p261 = pneg %p104
        %p262 = pneg %p101
        %p263 = pneg %p125
        %p264 = pneg %p122
        %p265 = pneg %p151
        %p266 = pneg %p148
        %p267 = scmp.lt.s32.totalorder %s20, 1
        %s268 = scalar_select %p267, %s20, 1
        %s269 = smul.addr %s268, 8
        %s270 = scalar_lea.vmem %s5, %s269
        %p271 = scmp.lt.s32.totalorder %s20, 1
        %s272 = scalar_select %p271, %s20, 1
        %s273 = smul.addr %s272, 8
        %s274 = scalar_lea.vmem %s5, %s273
        %v275 = vld [vmem:[%s234] sm:$0xff]
        %v276 = vld [vmem:[#allocation4] sm:$0xff]
        %v277 = vld [vmem:[#allocation4 + $0x8] sm:$0xff]
        %v278 = vld [vmem:[#allocation4 + $0x10] sm:$0xff]
        %v279 = vld [vmem:[#allocation4 + $0x18] sm:$0xff]
        %v280 = vld [vmem:[%s2] sm:$0x1]
        %v282 = vperm.slane %v280, 0
        %vm284 = vcmask 261120
        %v286 = vsel %vm284, %v275, 0
        %288 = vmatpush.msra.mxu0 0.0
        %289 = vmatpush.msra.mxu0 0.0
        %290 = vmatpush.msra.mxu0 0.0
        %291 = vmatpush.msra.mxu0 0.0
        %292 = vmatpush.msra.mxu0 0.0
        %293 = vmatpush.msra.mxu0 0.0
        %294 = vmatpush.msra.mxu0 0.0
        %295 = vmatpush.msra.mxu0 0.0
        %296 = vmatpush.msra.mxu0 0.0
        %297 = vmatpush.msra.mxu0 0.0
        %298 = vmatpush.msra.mxu0 0.0
        %299 = vmatpush.msra.mxu0 0.0
        %300 = vmatpush.msra.mxu0 %v279
        %301 = vmatpush.msra.mxu0 %v278
        %302 = vmatpush.msra.mxu0 %v277
        %303 = vmatpush.msra.mxu0 %v276
        %304 = vmatmul.f32.gmra.mxu0 %v286
        %v305 = vpop.f32.mrf.mxu0
        %v306 = vadd.f32 %v282, %v305
        %307 = vdwg.mxu0
        %v308 = vmax.f32 %v306, 0.0
        %v309 = vld [vmem:[#allocation6] sm:$0xff]
        %v310 = vld [vmem:[#allocation6 + $0x8] sm:$0xff]
        %v311 = vld [vmem:[#allocation6 + $0x10] sm:$0xff]
        %v312 = vld [vmem:[#allocation6 + $0x18] sm:$0xff]
        %v313 = vld [vmem:[#allocation6 + $0x20] sm:$0xff]
        %v314 = vld [vmem:[#allocation6 + $0x28] sm:$0xff]
        %v315 = vld [vmem:[#allocation6 + $0x30] sm:$0xff]
        %v316 = vld [vmem:[#allocation6 + $0x38] sm:$0xff]
        %v317 = vld [vmem:[#allocation6 + $0x40] sm:$0xff]
        %v318 = vld [vmem:[#allocation6 + $0x48] sm:$0xff]
        %v319 = vld [vmem:[#allocation6 + $0x50] sm:$0xff]
        %v320 = vld [vmem:[#allocation6 + $0x58] sm:$0xff]
        %v321 = vld [vmem:[#allocation6 + $0x60] sm:$0xff]
        %v322 = vld [vmem:[#allocation6 + $0x68] sm:$0xff]
        %v323 = vld [vmem:[#allocation6 + $0x70] sm:$0xff]
        %v324 = vld [vmem:[#allocation6 + $0x78] sm:$0xff]
        %v325 = vld [vmem:[%s4] sm:$0x1]
        %v327 = vperm.slane %v325, 0
        %329 = vmatpush.msra.mxu0 %v324
        %330 = vmatpush.msra.mxu0 %v323
        %331 = vmatpush.msra.mxu0 %v322
        %332 = vmatpush.msra.mxu0 %v321
        %333 = vmatpush.msra.mxu0 %v320
        %334 = vmatpush.msra.mxu0 %v319
        %335 = vmatpush.msra.mxu0 %v318
        %336 = vmatpush.msra.mxu0 %v317
        %337 = vmatpush.msra.mxu0 %v316
        %338 = vmatpush.msra.mxu0 %v315
        %339 = vmatpush.msra.mxu0 %v314
        %340 = vmatpush.msra.mxu0 %v313
        %341 = vmatpush.msra.mxu0 %v312
        %342 = vmatpush.msra.mxu0 %v311
        %343 = vmatpush.msra.mxu0 %v310
        %344 = vmatpush.msra.mxu0 %v309
        %345 = vmatmul.f32.gmra.mxu0 %v308
        %v346 = vpop.f32.mrf.mxu0
        %v347 = vadd.f32 %v327, %v346
        %348 = vdwg.mxu0
        %349 = vst [vmem:[%s274] sm:$0xff] %v347
        %p350 = scmp.lt.s32.totalorder %s20, 1
        %s351 = scalar_select %p350, %s20, 1
        %s352 = smul.addr %s351, 8
        %s353 = scalar_lea.vmem %s5, %s352
        // Predicated region
        $region53: #{ffn_apply.1} parent=39 // pred_check
          %p354 = pneg %p148
        $region54: #{ffn_apply.1} parent=39 // pred_check_branch
          %356 = sbr.rel (%p354) target = $region56
        $region55: #{ffn_apply.1} parent=39 // pred_region
          _
        $region56: #{ffn_apply.1} parent=39 // pred_fallthru
          _
      $region40: #{ffn_apply.1} parent=5 // pred_fallthru
        _
      %p357 = scmp.le.s32.totalorder 2, %s15
      // Predicated region
      $region57: #{ffn_apply.1} parent=5 // pred_check
        %p358 = pneg %p357
      $region58: #{ffn_apply.1} parent=5 // pred_check_branch
        %360 = sbr.rel (%p358) target = $region60
      $region59: #{ffn_apply.1} parent=5 // pred_region
        %s361 = ssub.s32 %s15, 2
        // Predicated region
        $region61: #{ffn_apply.1} parent=59 // pred_check
          %p362 = pneg %p154
        $region62: #{ffn_apply.1} parent=59 // pred_check_branch
          %364 = sbr.rel (%p362) target = $region64
        $region63: #{ffn_apply.1} parent=59 // pred_region
          %p365 = scmp.lt.s32.totalorder %s21, 1
          %s366 = scalar_select %p365, %s21, 1
          %s367 = smul.addr %s366, 8
          %s368 = scalar_lea.vmem %s5, %s367
        $region64: #{ffn_apply.1} parent=59 // pred_fallthru
          _
      $region60: #{ffn_apply.1} parent=5 // pred_fallthru
        _
    $region6: #{ffn_apply.1} parent=1 // loop_footer
      %s19 = sadd.s32 1, %s15
    $region7: #{ffn_apply.1} parent=1 // loop_footer_branch
      %14 = sbr.rel target = $region3
    $region8: #{ffn_apply.1} parent=1 // loop_exit
      _
    %369 = vsyncpa [#allocation3], 1
    %s370 = scalar_lea.sflag [#allocation3], 1
    %371 = vsyncpa %s370, 1
    %372 = vsyncpa [#allocation5], 1

</llo_original>
